<compile_context>
chip_gen: v7x
topology: tpu7x:2x2x1
jax: 0.10.0
libtpu: 0.0.40
codegen_flags: <defaults>
</compile_context>

<pallas_src>
import jax
import jax.numpy as jnp
from jax.experimental import pallas as pl
from jax.experimental.pallas import tpu as pltpu


def _round_up(x, m):
    return ((x + m - 1) // m) * m


def _pe_kernel(xyz_ref, w1_ref, b1_ref, w2_ref, b2_ref, out_ref):
    # xyz_ref: (T, 3), w1_ref: (3, E), b1_ref: (1, E),
    # w2_ref: (E, E), b2_ref: (1, E), out_ref: (T, E)
    x = xyz_ref[...].astype(jnp.float32)
    w1 = w1_ref[...]
    # K=3 contraction as three broadcast FMAs on the VPU (MXU would pad the
    # contraction depth to 128/256 and waste nearly the whole pass).
    h = (x[:, 0:1] * w1[0:1, :]
         + x[:, 1:2] * w1[1:2, :]
         + x[:, 2:3] * w1[2:3, :]
         + b1_ref[...])
    h = jnp.maximum(h, 0.0)  # ReLU
    o = jnp.dot(h, w2_ref[...], preferred_element_type=jnp.float32) + b2_ref[...]
    out_ref[...] = o.astype(out_ref.dtype)


def learned_abs_pe_3d(xyz, w1f, b1f, w2, b2, *, tile_n=2048, out_dtype=None):
    """Learned absolute 3D position encoding (inference).

    xyz: (B, N, 3) -> (B, N, E).  BatchNorm is folded (eval mode) into w1f/b1f.
    """
    B, N, C = xyz.shape
    E = w2.shape[1]
    if out_dtype is None:
        out_dtype = xyz.dtype

    # Flatten batch into the row axis and pad rows up to a tile multiple.
    M = B * N
    tile = min(tile_n, _round_up(M, 8))
    M_pad = _round_up(M, tile)
    x2d = xyz.reshape(M, C)
    if M_pad != M:
        x2d = jnp.pad(x2d, ((0, M_pad - M), (0, 0)))

    grid = (M_pad // tile,)
    out2d = pl.pallas_call(
        _pe_kernel,
        out_shape=jax.ShapeDtypeStruct((M_pad, E), out_dtype),
        grid_spec=pl.GridSpec(
            grid=grid,
            in_specs=[
                pl.BlockSpec((tile, C), lambda i: (i, 0)),  # xyz row tile
                pl.BlockSpec((C, E), lambda i: (0, 0)),     # folded W1 (VMEM-resident)
                pl.BlockSpec((1, E), lambda i: (0, 0)),     # folded b1
                pl.BlockSpec((E, E), lambda i: (0, 0)),     # W2
                pl.BlockSpec((1, E), lambda i: (0, 0)),     # b2
            ],
            out_specs=pl.BlockSpec((tile, E), lambda i: (i, 0)),
        ),
        compiler_params=pltpu.CompilerParams(
            dimension_semantics=("parallel",)
        ),
    )(x2d, w1f, b1f, w2, b2)

    return out2d[:M].reshape(B, N, E)


def make_params(key, input_dim=3, embedding_dim=32):
    """Deterministic synthetic parameters matching the PyTorch module shapes."""
    ks = jax.random.split(key, 8)
    # Conv1d(input_dim, E, k=1): weight (E, input_dim, 1) -> (E, input_dim); bias (E,)
    w1 = jax.random.normal(ks[0], (embedding_dim, input_dim), jnp.float32) * 0.2
    b1 = jax.random.normal(ks[1], (embedding_dim,), jnp.float32) * 0.1
    # BatchNorm1d(E) params / running stats (eval mode)
    gamma = 1.0 + 0.1 * jax.random.normal(ks[2], (embedding_dim,), jnp.float32)
    beta = 0.1 * jax.random.normal(ks[3], (embedding_dim,), jnp.float32)
    running_mean = 0.05 * jax.random.normal(ks[4], (embedding_dim,), jnp.float32)
    running_var = jnp.abs(1.0 + 0.1 * jax.random.normal(ks[5], (embedding_dim,), jnp.float32))
    eps = 1e-5
    # Conv1d(E, E, k=1)
    w2 = jax.random.normal(ks[6], (embedding_dim, embedding_dim), jnp.float32) * 0.1
    b2 = jax.random.normal(ks[7], (embedding_dim,), jnp.float32) * 0.1

    # Fold BN (eval mode) into the first conv:
    #   bn(conv1(x)) = ((x @ W1^T + b1) - mean) / sqrt(var+eps) * gamma + beta
    scale = gamma / jnp.sqrt(running_var + eps)                 # (E,)
    w1f = (w1 * scale[:, None]).T                               # (input_dim, E)
    b1f = ((b1 - running_mean) * scale + beta)[None, :]         # (1, E)
    w2t = w2.T                                                  # (E, E), y = h @ W2^T
    b2r = b2[None, :]                                           # (1, E)
    return w1f, b1f, w2t, b2r


def reference(xyz, w1f, b1f, w2t, b2r):
    h = jnp.maximum(jnp.einsum("bnc,ce->bne", xyz, w1f) + b1f[None], 0.0)
    return jnp.einsum("bne,ef->bnf", h, w2t) + b2r[None]


if __name__ == "__main__":
    C, E = 3, 32
    key = jax.random.PRNGKey(0)
    k_x, k_x2, k_p = jax.random.split(key, 3)
    w1f, b1f, w2t, b2r = make_params(k_p, input_dim=C, embedding_dim=E)

    # Case 1: small canonical shape (B=2, N=128).
    B, N = 2, 128
    xyz = jax.random.uniform(k_x, (B, N, C), jnp.float32)
    out = jax.block_until_ready(learned_abs_pe_3d(xyz, w1f, b1f, w2t, b2r))
    ref = reference(xyz, w1f, b1f, w2t, b2r)
    assert out.shape == (B, N, E)
    assert jnp.allclose(out, ref, atol=1e-4, rtol=1e-4), "mismatch vs reference (case 1)"

    # Case 2: N not a multiple of the tile (exercises the flatten+pad path).
    B2, N2 = 2, 100
    xyz2 = jax.random.uniform(k_x2, (B2, N2, C), jnp.float32)
    out2 = jax.block_until_ready(learned_abs_pe_3d(xyz2, w1f, b1f, w2t, b2r))
    ref2 = reference(xyz2, w1f, b1f, w2t, b2r)
    assert out2.shape == (B2, N2, E)
    assert jnp.allclose(out2, ref2, atol=1e-4, rtol=1e-4), "mismatch vs reference (case 2)"

    print("KERNEL_OK")
</pallas_src>

<mosaic_0001>
module attributes {stable_mosaic.version = 11 : i64} {
  func.func @_pe_kernel(%arg0: i32, %arg1: memref<256x3xf32, #tpu.memory_space<vmem>>, %arg2: memref<3x32xf32, #tpu.memory_space<vmem>>, %arg3: memref<1x32xf32, #tpu.memory_space<vmem>>, %arg4: memref<32x32xf32, #tpu.memory_space<vmem>>, %arg5: memref<1x32xf32, #tpu.memory_space<vmem>>, %arg6: memref<256x32xf32, #tpu.memory_space<vmem>>) attributes {dimension_semantics = [#tpu.dimension_semantics<parallel>], iteration_bounds = array<i64: 1>, scalar_prefetch = 0 : i64, scratch_operands = 0 : i64, tpu.core_type = #tpu.core_type<tc>, window_params = [{transform_indices = @transform_0, window_bounds = array<i64: 256, 3>}, {pipeline_mode = #tpu.pipeline_mode<synchronous>, transform_indices = @transform_1, window_bounds = array<i64: 3, 32>}, {pipeline_mode = #tpu.pipeline_mode<synchronous>, transform_indices = @transform_2, window_bounds = array<i64: 1, 32>}, {pipeline_mode = #tpu.pipeline_mode<synchronous>, transform_indices = @transform_3, window_bounds = array<i64: 32, 32>}, {pipeline_mode = #tpu.pipeline_mode<synchronous>, transform_indices = @transform_4, window_bounds = array<i64: 1, 32>}, {transform_indices = @transform_5, window_bounds = array<i64: 256, 32>}]} {
    %c0 = arith.constant 0 : index
    %c0_0 = arith.constant 0 : index
    %0 = vector.load %arg1[%c0, %c0_0] : memref<256x3xf32, #tpu.memory_space<vmem>>, vector<256x3xf32>
    %c0_1 = arith.constant 0 : index
    %c0_2 = arith.constant 0 : index
    %1 = vector.load %arg2[%c0_1, %c0_2] : memref<3x32xf32, #tpu.memory_space<vmem>>, vector<3x32xf32>
    %2 = vector.extract_strided_slice %0 {offsets = [0, 0], sizes = [256, 1], strides = [1, 1]} : vector<256x3xf32> to vector<256x1xf32>
    %3 = vector.extract_strided_slice %1 {offsets = [0, 0], sizes = [1, 32], strides = [1, 1]} : vector<3x32xf32> to vector<1x32xf32>
    %4 = vector.broadcast %2 : vector<256x1xf32> to vector<256x32xf32>
    %5 = vector.broadcast %3 : vector<1x32xf32> to vector<256x32xf32>
    %6 = arith.mulf %4, %5 : vector<256x32xf32>
    %7 = vector.extract_strided_slice %0 {offsets = [0, 1], sizes = [256, 1], strides = [1, 1]} : vector<256x3xf32> to vector<256x1xf32>
    %8 = vector.extract_strided_slice %1 {offsets = [1, 0], sizes = [1, 32], strides = [1, 1]} : vector<3x32xf32> to vector<1x32xf32>
    %9 = vector.broadcast %7 : vector<256x1xf32> to vector<256x32xf32>
    %10 = vector.broadcast %8 : vector<1x32xf32> to vector<256x32xf32>
    %11 = arith.mulf %9, %10 : vector<256x32xf32>
    %12 = arith.addf %6, %11 : vector<256x32xf32>
    %13 = vector.extract_strided_slice %0 {offsets = [0, 2], sizes = [256, 1], strides = [1, 1]} : vector<256x3xf32> to vector<256x1xf32>
    %14 = vector.extract_strided_slice %1 {offsets = [2, 0], sizes = [1, 32], strides = [1, 1]} : vector<3x32xf32> to vector<1x32xf32>
    %15 = vector.broadcast %13 : vector<256x1xf32> to vector<256x32xf32>
    %16 = vector.broadcast %14 : vector<1x32xf32> to vector<256x32xf32>
    %17 = arith.mulf %15, %16 : vector<256x32xf32>
    %18 = arith.addf %12, %17 : vector<256x32xf32>
    %c0_3 = arith.constant 0 : index
    %c0_4 = arith.constant 0 : index
    %19 = vector.load %arg3[%c0_3, %c0_4] : memref<1x32xf32, #tpu.memory_space<vmem>>, vector<1x32xf32>
    %20 = vector.broadcast %19 : vector<1x32xf32> to vector<256x32xf32>
    %21 = arith.addf %18, %20 : vector<256x32xf32>
    %cst = arith.constant 0.000000e+00 : f32
    %22 = vector.broadcast %cst : f32 to vector<256x32xf32>
    %23 = arith.maximumf %21, %22 : vector<256x32xf32>
    %c0_5 = arith.constant 0 : index
    %c0_6 = arith.constant 0 : index
    %24 = vector.load %arg4[%c0_5, %c0_6] : memref<32x32xf32, #tpu.memory_space<vmem>>, vector<32x32xf32>
    %cst_7 = arith.constant dense<0.000000e+00> : vector<256x32xf32>
    %25 = tpu.matmul %23, %24, %cst_7 {dimension_numbers = #tpu.dot_dimension_numbers<[1], [0], [0], [1], [0, 0, 1, 1], [], []>} : vector<256x32xf32>, vector<32x32xf32>, vector<256x32xf32> -> vector<256x32xf32>
    %c0_8 = arith.constant 0 : index
    %c0_9 = arith.constant 0 : index
    %26 = vector.load %arg5[%c0_8, %c0_9] : memref<1x32xf32, #tpu.memory_space<vmem>>, vector<1x32xf32>
    %27 = vector.broadcast %26 : vector<1x32xf32> to vector<256x32xf32>
    %28 = arith.addf %25, %27 : vector<256x32xf32>
    %c0_10 = arith.constant 0 : index
    %c0_11 = arith.constant 0 : index
    %29 = vector.load %arg6[%c0_10, %c0_11] : memref<256x32xf32, #tpu.memory_space<vmem>>, vector<256x32xf32>
    tpu.vector_store %arg6[%c0_10, %c0_11], %28 {strides = array<i32>} : memref<256x32xf32, #tpu.memory_space<vmem>>, vector<256x32xf32>,
    return
  }
  func.func @transform_0(%arg0: i32) -> (i32, i32) {
    %c0_i32 = arith.constant 0 : i32
    %c0_i32_0 = arith.constant 0 : i32
    return %arg0, %c0_i32 : i32, i32
  }
  func.func @transform_1(%arg0: i32) -> (i32, i32) {
    %c0_i32 = arith.constant 0 : i32
    %c0_i32_0 = arith.constant 0 : i32
    %c0_i32_1 = arith.constant 0 : i32
    return %c0_i32, %c0_i32_0 : i32, i32
  }
  func.func @transform_2(%arg0: i32) -> (i32, i32) {
    %c0_i32 = arith.constant 0 : i32
    %c0_i32_0 = arith.constant 0 : i32
    %c0_i32_1 = arith.constant 0 : i32
    return %c0_i32, %c0_i32_0 : i32, i32
  }
  func.func @transform_3(%arg0: i32) -> (i32, i32) {
    %c0_i32 = arith.constant 0 : i32
    %c0_i32_0 = arith.constant 0 : i32
    %c0_i32_1 = arith.constant 0 : i32
    return %c0_i32, %c0_i32_0 : i32, i32
  }
  func.func @transform_4(%arg0: i32) -> (i32, i32) {
    %c0_i32 = arith.constant 0 : i32
    %c0_i32_0 = arith.constant 0 : i32
    %c0_i32_1 = arith.constant 0 : i32
    return %c0_i32, %c0_i32_0 : i32, i32
  }
  func.func @transform_5(%arg0: i32) -> (i32, i32) {
    %c0_i32 = arith.constant 0 : i32
    %c0_i32_0 = arith.constant 0 : i32
    return %arg0, %c0_i32 : i32, i32
  }
}

</mosaic_0001>

<llo_original>
// kernel: tpu_custom_call.1
$region0: #{tpu_custom_call.1}
  #allocation0 [shape = 'u32[]', space=smem, size = 0x4, offset = 0x4, fixed_abs, tag = 'smem constant byte address 0x4 - core index']
  #allocation1 [shape = 'u32[144,128]{1,0:T(1,128)}', space=vmem, size = 0x12000, scoped, tag = 'internal scratch']
  %s0 = inlined_call_operand.vmem [shape: f32[256,3], index: 0, kind: input, shape index: {}]
  %s1 = inlined_call_operand.vmem [shape: f32[3,32], index: 1, kind: input, shape index: {}]
  %s2 = inlined_call_operand.vmem [shape: f32[1,32], index: 2, kind: input, shape index: {}]
  %s3 = inlined_call_operand.vmem [shape: f32[32,32], index: 3, kind: input, shape index: {}]
  %s4 = inlined_call_operand.vmem [shape: f32[1,32], index: 4, kind: input, shape index: {}]
  %s5 = inlined_call_operand.vmem [shape: f32[256,32], index: 5, kind: output, shape index: {}]
  %s6 = sld [smem:[#allocation0]]
  $region30: #{tpu_custom_call.1} parent=0
    _
  %s8 = ssub.s32 1, %s6
  %s9 = scalar_select 0, %s8, %s6
  // Predicated region
  $region2: #{tpu_custom_call.1} parent=0 // pred_check
    _
  $region3: #{tpu_custom_call.1} parent=0 // pred_check_branch
    %11 = sbr.rel (0) target = $region5
  $region4: #{tpu_custom_call.1} parent=0 // pred_region
    _
  $region5: #{tpu_custom_call.1} parent=0 // pred_fallthru
    _
  // Predicated region
  $region6: #{tpu_custom_call.1} parent=0 // pred_check
    _
  $region7: #{tpu_custom_call.1} parent=0 // pred_check_branch
    %13 = sbr.rel (0) target = $region9
  $region8: #{tpu_custom_call.1} parent=0 // pred_region
    _
  $region9: #{tpu_custom_call.1} parent=0 // pred_fallthru
    _
  // Predicated region
  $region10: #{tpu_custom_call.1} parent=0 // pred_check
    _
  $region11: #{tpu_custom_call.1} parent=0 // pred_check_branch
    %15 = sbr.rel (0) target = $region13
  $region12: #{tpu_custom_call.1} parent=0 // pred_region
    _
  $region13: #{tpu_custom_call.1} parent=0 // pred_fallthru
    _
  // Predicated region
  $region14: #{tpu_custom_call.1} parent=0 // pred_check
    _
  $region15: #{tpu_custom_call.1} parent=0 // pred_check_branch
    %17 = sbr.rel (0) target = $region17
  $region16: #{tpu_custom_call.1} parent=0 // pred_region
    _
  $region17: #{tpu_custom_call.1} parent=0 // pred_fallthru
    _
  // Predicated region
  $region18: #{tpu_custom_call.1} parent=0 // pred_check
    _
  $region19: #{tpu_custom_call.1} parent=0 // pred_check_branch
    %19 = sbr.rel (0) target = $region21
  $region20: #{tpu_custom_call.1} parent=0 // pred_region
    _
  $region21: #{tpu_custom_call.1} parent=0 // pred_fallthru
    _
  %v20 = vld [vmem:[%s0] sm:$0xff]
  %v21 = vld [vmem:[%s0 + $0x8] sm:$0xff]
  %v22 = vld [vmem:[%s0 + $0x10] sm:$0xff]
  %v23 = vld [vmem:[%s0 + $0x18] sm:$0xff]
  %v24 = vld [vmem:[%s0 + $0x20] sm:$0xff]
  %v25 = vld [vmem:[%s0 + $0x28] sm:$0xff]
  %v26 = vld [vmem:[%s0 + $0x30] sm:$0xff]
  %v27 = vld [vmem:[%s0 + $0x38] sm:$0xff]
  %v28 = vld [vmem:[%s0 + $0x40] sm:$0xff]
  %v29 = vld [vmem:[%s0 + $0x48] sm:$0xff]
  %v30 = vld [vmem:[%s0 + $0x50] sm:$0xff]
  %v31 = vld [vmem:[%s0 + $0x58] sm:$0xff]
  %v32 = vld [vmem:[%s0 + $0x60] sm:$0xff]
  %v33 = vld [vmem:[%s0 + $0x68] sm:$0xff]
  %v34 = vld [vmem:[%s0 + $0x70] sm:$0xff]
  %v35 = vld [vmem:[%s0 + $0x78] sm:$0xff]
  %v36 = vld [vmem:[%s0 + $0x80] sm:$0xff]
  %v37 = vld [vmem:[%s0 + $0x88] sm:$0xff]
  %v38 = vld [vmem:[%s0 + $0x90] sm:$0xff]
  %v39 = vld [vmem:[%s0 + $0x98] sm:$0xff]
  %v40 = vld [vmem:[%s0 + $0xa0] sm:$0xff]
  %v41 = vld [vmem:[%s0 + $0xa8] sm:$0xff]
  %v42 = vld [vmem:[%s0 + $0xb0] sm:$0xff]
  %v43 = vld [vmem:[%s0 + $0xb8] sm:$0xff]
  %v44 = vld [vmem:[%s0 + $0xc0] sm:$0xff]
  %v45 = vld [vmem:[%s0 + $0xc8] sm:$0xff]
  %v46 = vld [vmem:[%s0 + $0xd0] sm:$0xff]
  %v47 = vld [vmem:[%s0 + $0xd8] sm:$0xff]
  %v48 = vld [vmem:[%s0 + $0xe0] sm:$0xff]
  %v49 = vld [vmem:[%s0 + $0xe8] sm:$0xff]
  %v50 = vld [vmem:[%s0 + $0xf0] sm:$0xff]
  %v51 = vld [vmem:[%s0 + $0xf8] sm:$0xff]
  %v52 = vld [vmem:[%s1] sm:$0x7]
  %54 = vset.pattern.permute.xlu0 0
  %55 = vperm.xlu0 %54, %v20
  %v56 = vpop.permute.xlu0 %55
  %59 = vset.pattern.permute.xlu0 0
  %60 = vperm.xlu0 %59, %v21
  %v61 = vpop.permute.xlu0 %60
  %64 = vset.pattern.permute.xlu0 0
  %65 = vperm.xlu0 %64, %v22
  %v66 = vpop.permute.xlu0 %65
  %69 = vset.pattern.permute.xlu0 0
  %70 = vperm.xlu0 %69, %v23
  %v71 = vpop.permute.xlu0 %70
  %74 = vset.pattern.permute.xlu0 0
  %75 = vperm.xlu0 %74, %v24
  %v76 = vpop.permute.xlu0 %75
  %79 = vset.pattern.permute.xlu0 0
  %80 = vperm.xlu0 %79, %v25
  %v81 = vpop.permute.xlu0 %80
  %84 = vset.pattern.permute.xlu0 0
  %85 = vperm.xlu0 %84, %v26
  %v86 = vpop.permute.xlu0 %85
  %89 = vset.pattern.permute.xlu0 0
  %90 = vperm.xlu0 %89, %v27
  %v91 = vpop.permute.xlu0 %90
  %94 = vset.pattern.permute.xlu0 0
  %95 = vperm.xlu0 %94, %v28
  %v96 = vpop.permute.xlu0 %95
  %99 = vset.pattern.permute.xlu0 0
  %100 = vperm.xlu0 %99, %v29
  %v101 = vpop.permute.xlu0 %100
  %104 = vset.pattern.permute.xlu0 0
  %105 = vperm.xlu0 %104, %v30
  %v106 = vpop.permute.xlu0 %105
  %109 = vset.pattern.permute.xlu0 0
  %110 = vperm.xlu0 %109, %v31
  %v111 = vpop.permute.xlu0 %110
  %114 = vset.pattern.permute.xlu0 0
  %115 = vperm.xlu0 %114, %v32
  %v116 = vpop.permute.xlu0 %115
  %119 = vset.pattern.permute.xlu0 0
  %120 = vperm.xlu0 %119, %v33
  %v121 = vpop.permute.xlu0 %120
  %124 = vset.pattern.permute.xlu0 0
  %125 = vperm.xlu0 %124, %v34
  %v126 = vpop.permute.xlu0 %125
  %129 = vset.pattern.permute.xlu0 0
  %130 = vperm.xlu0 %129, %v35
  %v131 = vpop.permute.xlu0 %130
  %134 = vset.pattern.permute.xlu0 0
  %135 = vperm.xlu0 %134, %v36
  %v136 = vpop.permute.xlu0 %135
  %139 = vset.pattern.permute.xlu0 0
  %140 = vperm.xlu0 %139, %v37
  %v141 = vpop.permute.xlu0 %140
  %144 = vset.pattern.permute.xlu0 0
  %145 = vperm.xlu0 %144, %v38
  %v146 = vpop.permute.xlu0 %145
  %149 = vset.pattern.permute.xlu0 0
  %150 = vperm.xlu0 %149, %v39
  %v151 = vpop.permute.xlu0 %150
  %154 = vset.pattern.permute.xlu0 0
  %155 = vperm.xlu0 %154, %v40
  %v156 = vpop.permute.xlu0 %155
  %159 = vset.pattern.permute.xlu0 0
  %160 = vperm.xlu0 %159, %v41
  %v161 = vpop.permute.xlu0 %160
  %164 = vset.pattern.permute.xlu0 0
  %165 = vperm.xlu0 %164, %v42
  %v166 = vpop.permute.xlu0 %165
  %169 = vset.pattern.permute.xlu0 0
  %170 = vperm.xlu0 %169, %v43
  %v171 = vpop.permute.xlu0 %170
  %174 = vset.pattern.permute.xlu0 0
  %175 = vperm.xlu0 %174, %v44
  %v176 = vpop.permute.xlu0 %175
  %179 = vset.pattern.permute.xlu0 0
  %180 = vperm.xlu0 %179, %v45
  %v181 = vpop.permute.xlu0 %180
  %184 = vset.pattern.permute.xlu0 0
  %185 = vperm.xlu0 %184, %v46
  %v186 = vpop.permute.xlu0 %185
  %189 = vset.pattern.permute.xlu0 0
  %190 = vperm.xlu0 %189, %v47
  %v191 = vpop.permute.xlu0 %190
  %194 = vset.pattern.permute.xlu0 0
  %195 = vperm.xlu0 %194, %v48
  %v196 = vpop.permute.xlu0 %195
  %199 = vset.pattern.permute.xlu0 0
  %200 = vperm.xlu0 %199, %v49
  %v201 = vpop.permute.xlu0 %200
  %204 = vset.pattern.permute.xlu0 0
  %205 = vperm.xlu0 %204, %v50
  %v206 = vpop.permute.xlu0 %205
  %209 = vset.pattern.permute.xlu0 0
  %210 = vperm.xlu0 %209, %v51
  %v211 = vpop.permute.xlu0 %210
  %v213 = vlaneseq
  %v214 = vshrl.u32 %v213, 7
  %v215 = vsub.s32 0, %v214
  %v216 = vrot.slane %v52, %v215
  %v217 = vmul.f32 %v56, %v216
  %v218 = vmul.f32 %v61, %v216
  %v219 = vmul.f32 %v66, %v216
  %v220 = vmul.f32 %v71, %v216
  %v221 = vmul.f32 %v76, %v216
  %v222 = vmul.f32 %v81, %v216
  %v223 = vmul.f32 %v86, %v216
  %v224 = vmul.f32 %v91, %v216
  %v225 = vmul.f32 %v96, %v216
  %v226 = vmul.f32 %v101, %v216
  %v227 = vmul.f32 %v106, %v216
  %v228 = vmul.f32 %v111, %v216
  %v229 = vmul.f32 %v116, %v216
  %v230 = vmul.f32 %v121, %v216
  %v231 = vmul.f32 %v126, %v216
  %v232 = vmul.f32 %v131, %v216
  %v233 = vmul.f32 %v136, %v216
  %v234 = vmul.f32 %v141, %v216
  %v235 = vmul.f32 %v146, %v216
  %v236 = vmul.f32 %v151, %v216
  %v237 = vmul.f32 %v156, %v216
  %v238 = vmul.f32 %v161, %v216
  %v239 = vmul.f32 %v166, %v216
  %v240 = vmul.f32 %v171, %v216
  %v241 = vmul.f32 %v176, %v216
  %v242 = vmul.f32 %v181, %v216
  %v243 = vmul.f32 %v186, %v216
  %v244 = vmul.f32 %v191, %v216
  %v245 = vmul.f32 %v196, %v216
  %v246 = vmul.f32 %v201, %v216
  %v247 = vmul.f32 %v206, %v216
  %v248 = vmul.f32 %v211, %v216
  %249 = vset.pattern.permute.xlu0 1
  %250 = vperm.xlu0 %249, %v20
  %v251 = vpop.permute.xlu0 %250
  %253 = vset.pattern.permute.xlu0 1
  %254 = vperm.xlu0 %253, %v21
  %v255 = vpop.permute.xlu0 %254
  %257 = vset.pattern.permute.xlu0 1
  %258 = vperm.xlu0 %257, %v22
  %v259 = vpop.permute.xlu0 %258
  %261 = vset.pattern.permute.xlu0 1
  %262 = vperm.xlu0 %261, %v23
  %v263 = vpop.permute.xlu0 %262
  %265 = vset.pattern.permute.xlu0 1
  %266 = vperm.xlu0 %265, %v24
  %v267 = vpop.permute.xlu0 %266
  %269 = vset.pattern.permute.xlu0 1
  %270 = vperm.xlu0 %269, %v25
  %v271 = vpop.permute.xlu0 %270
  %273 = vset.pattern.permute.xlu0 1
  %274 = vperm.xlu0 %273, %v26
  %v275 = vpop.permute.xlu0 %274
  %277 = vset.pattern.permute.xlu0 1
  %278 = vperm.xlu0 %277, %v27
  %v279 = vpop.permute.xlu0 %278
  %281 = vset.pattern.permute.xlu0 1
  %282 = vperm.xlu0 %281, %v28
  %v283 = vpop.permute.xlu0 %282
  %285 = vset.pattern.permute.xlu0 1
  %286 = vperm.xlu0 %285, %v29
  %v287 = vpop.permute.xlu0 %286
  %289 = vset.pattern.permute.xlu0 1
  %290 = vperm.xlu0 %289, %v30
  %v291 = vpop.permute.xlu0 %290
  %293 = vset.pattern.permute.xlu0 1
  %294 = vperm.xlu0 %293, %v31
  %v295 = vpop.permute.xlu0 %294
  %297 = vset.pattern.permute.xlu0 1
  %298 = vperm.xlu0 %297, %v32
  %v299 = vpop.permute.xlu0 %298
  %301 = vset.pattern.permute.xlu0 1
  %302 = vperm.xlu0 %301, %v33
  %v303 = vpop.permute.xlu0 %302
  %305 = vset.pattern.permute.xlu0 1
  %306 = vperm.xlu0 %305, %v34
  %v307 = vpop.permute.xlu0 %306
  %309 = vset.pattern.permute.xlu0 1
  %310 = vperm.xlu0 %309, %v35
  %v311 = vpop.permute.xlu0 %310
  %313 = vset.pattern.permute.xlu0 1
  %314 = vperm.xlu0 %313, %v36
  %v315 = vpop.permute.xlu0 %314
  %317 = vset.pattern.permute.xlu0 1
  %318 = vperm.xlu0 %317, %v37
  %v319 = vpop.permute.xlu0 %318
  %321 = vset.pattern.permute.xlu0 1
  %322 = vperm.xlu0 %321, %v38
  %v323 = vpop.permute.xlu0 %322
  %325 = vset.pattern.permute.xlu0 1
  %326 = vperm.xlu0 %325, %v39
  %v327 = vpop.permute.xlu0 %326
  %329 = vset.pattern.permute.xlu0 1
  %330 = vperm.xlu0 %329, %v40
  %v331 = vpop.permute.xlu0 %330
  %333 = vset.pattern.permute.xlu0 1
  %334 = vperm.xlu0 %333, %v41
  %v335 = vpop.permute.xlu0 %334
  %337 = vset.pattern.permute.xlu0 1
  %338 = vperm.xlu0 %337, %v42
  %v339 = vpop.permute.xlu0 %338
  %341 = vset.pattern.permute.xlu0 1
  %342 = vperm.xlu0 %341, %v43
  %v343 = vpop.permute.xlu0 %342
  %345 = vset.pattern.permute.xlu0 1
  %346 = vperm.xlu0 %345, %v44
  %v347 = vpop.permute.xlu0 %346
  %349 = vset.pattern.permute.xlu0 1
  %350 = vperm.xlu0 %349, %v45
  %v351 = vpop.permute.xlu0 %350
  %353 = vset.pattern.permute.xlu0 1
  %354 = vperm.xlu0 %353, %v46
  %v355 = vpop.permute.xlu0 %354
  %357 = vset.pattern.permute.xlu0 1
  %358 = vperm.xlu0 %357, %v47
  %v359 = vpop.permute.xlu0 %358
  %361 = vset.pattern.permute.xlu0 1
  %362 = vperm.xlu0 %361, %v48
  %v363 = vpop.permute.xlu0 %362
  %365 = vset.pattern.permute.xlu0 1
  %366 = vperm.xlu0 %365, %v49
  %v367 = vpop.permute.xlu0 %366
  %369 = vset.pattern.permute.xlu0 1
  %370 = vperm.xlu0 %369, %v50
  %v371 = vpop.permute.xlu0 %370
  %373 = vset.pattern.permute.xlu0 1
  %374 = vperm.xlu0 %373, %v51
  %v375 = vpop.permute.xlu0 %374
  %v377 = vlaneseq
  %v378 = vshrl.u32 %v377, 7
  %v379 = vsub.s32 1, %v378
  %v380 = vrot.slane %v52, %v379
  %v381 = vmul.f32 %v251, %v380
  %v382 = vmul.f32 %v255, %v380
  %v383 = vmul.f32 %v259, %v380
  %v384 = vmul.f32 %v263, %v380
  %v385 = vmul.f32 %v267, %v380
  %v386 = vmul.f32 %v271, %v380
  %v387 = vmul.f32 %v275, %v380
  %v388 = vmul.f32 %v279, %v380
  %v389 = vmul.f32 %v283, %v380
  %v390 = vmul.f32 %v287, %v380
  %v391 = vmul.f32 %v291, %v380
  %v392 = vmul.f32 %v295, %v380
  %v393 = vmul.f32 %v299, %v380
  %v394 = vmul.f32 %v303, %v380
  %v395 = vmul.f32 %v307, %v380
  %v396 = vmul.f32 %v311, %v380
  %v397 = vmul.f32 %v315, %v380
  %v398 = vmul.f32 %v319, %v380
  %v399 = vmul.f32 %v323, %v380
  %v400 = vmul.f32 %v327, %v380
  %v401 = vmul.f32 %v331, %v380
  %v402 = vmul.f32 %v335, %v380
  %v403 = vmul.f32 %v339, %v380
  %v404 = vmul.f32 %v343, %v380
  %v405 = vmul.f32 %v347, %v380
  %v406 = vmul.f32 %v351, %v380
  %v407 = vmul.f32 %v355, %v380
  %v408 = vmul.f32 %v359, %v380
  %v409 = vmul.f32 %v363, %v380
  %v410 = vmul.f32 %v367, %v380
  %v411 = vmul.f32 %v371, %v380
  %v412 = vmul.f32 %v375, %v380
  %v413 = vadd.f32 %v217, %v381
  %v414 = vadd.f32 %v218, %v382
  %v415 = vadd.f32 %v219, %v383
  %v416 = vadd.f32 %v220, %v384
  %v417 = vadd.f32 %v221, %v385
  %v418 = vadd.f32 %v222, %v386
  %v419 = vadd.f32 %v223, %v387
  %v420 = vadd.f32 %v224, %v388
  %v421 = vadd.f32 %v225, %v389
  %v422 = vadd.f32 %v226, %v390
  %v423 = vadd.f32 %v227, %v391
  %v424 = vadd.f32 %v228, %v392
  %v425 = vadd.f32 %v229, %v393
  %v426 = vadd.f32 %v230, %v394
  %v427 = vadd.f32 %v231, %v395
  %v428 = vadd.f32 %v232, %v396
  %v429 = vadd.f32 %v233, %v397
  %v430 = vadd.f32 %v234, %v398
  %v431 = vadd.f32 %v235, %v399
  %v432 = vadd.f32 %v236, %v400
  %v433 = vadd.f32 %v237, %v401
  %v434 = vadd.f32 %v238, %v402
  %v435 = vadd.f32 %v239, %v403
  %v436 = vadd.f32 %v240, %v404
  %v437 = vadd.f32 %v241, %v405
  %v438 = vadd.f32 %v242, %v406
  %v439 = vadd.f32 %v243, %v407
  %v440 = vadd.f32 %v244, %v408
  %v441 = vadd.f32 %v245, %v409
  %v442 = vadd.f32 %v246, %v410
  %v443 = vadd.f32 %v247, %v411
  %v444 = vadd.f32 %v248, %v412
  %445 = vset.pattern.permute.xlu0 2
  %446 = vperm.xlu0 %445, %v20
  %v447 = vpop.permute.xlu0 %446
  %449 = vset.pattern.permute.xlu0 2
  %450 = vperm.xlu0 %449, %v21
  %v451 = vpop.permute.xlu0 %450
  %453 = vset.pattern.permute.xlu0 2
  %454 = vperm.xlu0 %453, %v22
  %v455 = vpop.permute.xlu0 %454
  %457 = vset.pattern.permute.xlu0 2
  %458 = vperm.xlu0 %457, %v23
  %v459 = vpop.permute.xlu0 %458
  %461 = vset.pattern.permute.xlu0 2
  %462 = vperm.xlu0 %461, %v24
  %v463 = vpop.permute.xlu0 %462
  %465 = vset.pattern.permute.xlu0 2
  %466 = vperm.xlu0 %465, %v25
  %v467 = vpop.permute.xlu0 %466
  %469 = vset.pattern.permute.xlu0 2
  %470 = vperm.xlu0 %469, %v26
  %v471 = vpop.permute.xlu0 %470
  %473 = vset.pattern.permute.xlu0 2
  %474 = vperm.xlu0 %473, %v27
  %v475 = vpop.permute.xlu0 %474
  %477 = vset.pattern.permute.xlu0 2
  %478 = vperm.xlu0 %477, %v28
  %v479 = vpop.permute.xlu0 %478
  %481 = vset.pattern.permute.xlu0 2
  %482 = vperm.xlu0 %481, %v29
  %v483 = vpop.permute.xlu0 %482
  %485 = vset.pattern.permute.xlu0 2
  %486 = vperm.xlu0 %485, %v30
  %v487 = vpop.permute.xlu0 %486
  %489 = vset.pattern.permute.xlu0 2
  %490 = vperm.xlu0 %489, %v31
  %v491 = vpop.permute.xlu0 %490
  %493 = vset.pattern.permute.xlu0 2
  %494 = vperm.xlu0 %493, %v32
  %v495 = vpop.permute.xlu0 %494
  %497 = vset.pattern.permute.xlu0 2
  %498 = vperm.xlu0 %497, %v33
  %v499 = vpop.permute.xlu0 %498
  %501 = vset.pattern.permute.xlu0 2
  %502 = vperm.xlu0 %501, %v34
  %v503 = vpop.permute.xlu0 %502
  %505 = vset.pattern.permute.xlu0 2
  %506 = vperm.xlu0 %505, %v35
  %v507 = vpop.permute.xlu0 %506
  %509 = vset.pattern.permute.xlu0 2
  %510 = vperm.xlu0 %509, %v36
  %v511 = vpop.permute.xlu0 %510
  %513 = vset.pattern.permute.xlu0 2
  %514 = vperm.xlu0 %513, %v37
  %v515 = vpop.permute.xlu0 %514
  %517 = vset.pattern.permute.xlu0 2
  %518 = vperm.xlu0 %517, %v38
  %v519 = vpop.permute.xlu0 %518
  %521 = vset.pattern.permute.xlu0 2
  %522 = vperm.xlu0 %521, %v39
  %v523 = vpop.permute.xlu0 %522
  %525 = vset.pattern.permute.xlu0 2
  %526 = vperm.xlu0 %525, %v40
  %v527 = vpop.permute.xlu0 %526
  %529 = vset.pattern.permute.xlu0 2
  %530 = vperm.xlu0 %529, %v41
  %v531 = vpop.permute.xlu0 %530
  %533 = vset.pattern.permute.xlu0 2
  %534 = vperm.xlu0 %533, %v42
  %v535 = vpop.permute.xlu0 %534
  %537 = vset.pattern.permute.xlu0 2
  %538 = vperm.xlu0 %537, %v43
  %v539 = vpop.permute.xlu0 %538
  %541 = vset.pattern.permute.xlu0 2
  %542 = vperm.xlu0 %541, %v44
  %v543 = vpop.permute.xlu0 %542
  %545 = vset.pattern.permute.xlu0 2
  %546 = vperm.xlu0 %545, %v45
  %v547 = vpop.permute.xlu0 %546
  %549 = vset.pattern.permute.xlu0 2
  %550 = vperm.xlu0 %549, %v46
  %v551 = vpop.permute.xlu0 %550
  %553 = vset.pattern.permute.xlu0 2
  %554 = vperm.xlu0 %553, %v47
  %v555 = vpop.permute.xlu0 %554
  %557 = vset.pattern.permute.xlu0 2
  %558 = vperm.xlu0 %557, %v48
  %v559 = vpop.permute.xlu0 %558
  %561 = vset.pattern.permute.xlu0 2
  %562 = vperm.xlu0 %561, %v49
  %v563 = vpop.permute.xlu0 %562
  %565 = vset.pattern.permute.xlu0 2
  %566 = vperm.xlu0 %565, %v50
  %v567 = vpop.permute.xlu0 %566
  %569 = vset.pattern.permute.xlu0 2
  %570 = vperm.xlu0 %569, %v51
  %v571 = vpop.permute.xlu0 %570
  %v573 = vlaneseq
  %v574 = vshrl.u32 %v573, 7
  %v575 = vsub.s32 2, %v574
  %v576 = vrot.slane %v52, %v575
  %v577 = vmul.f32 %v447, %v576
  %v578 = vmul.f32 %v451, %v576
  %v579 = vmul.f32 %v455, %v576
  %v580 = vmul.f32 %v459, %v576
  %v581 = vmul.f32 %v463, %v576
  %v582 = vmul.f32 %v467, %v576
  %v583 = vmul.f32 %v471, %v576
  %v584 = vmul.f32 %v475, %v576
  %v585 = vmul.f32 %v479, %v576
  %v586 = vmul.f32 %v483, %v576
  %v587 = vmul.f32 %v487, %v576
  %v588 = vmul.f32 %v491, %v576
  %v589 = vmul.f32 %v495, %v576
  %v590 = vmul.f32 %v499, %v576
  %v591 = vmul.f32 %v503, %v576
  %v592 = vmul.f32 %v507, %v576
  %v593 = vmul.f32 %v511, %v576
  %v594 = vmul.f32 %v515, %v576
  %v595 = vmul.f32 %v519, %v576
  %v596 = vmul.f32 %v523, %v576
  %v597 = vmul.f32 %v527, %v576
  %v598 = vmul.f32 %v531, %v576
  %v599 = vmul.f32 %v535, %v576
  %v600 = vmul.f32 %v539, %v576
  %v601 = vmul.f32 %v543, %v576
  %v602 = vmul.f32 %v547, %v576
  %v603 = vmul.f32 %v551, %v576
  %v604 = vmul.f32 %v555, %v576
  %v605 = vmul.f32 %v559, %v576
  %v606 = vmul.f32 %v563, %v576
  %v607 = vmul.f32 %v567, %v576
  %v608 = vmul.f32 %v571, %v576
  %v609 = vadd.f32 %v413, %v577
  %v610 = vadd.f32 %v414, %v578
  %v611 = vadd.f32 %v415, %v579
  %v612 = vadd.f32 %v416, %v580
  %v613 = vadd.f32 %v417, %v581
  %v614 = vadd.f32 %v418, %v582
  %v615 = vadd.f32 %v419, %v583
  %v616 = vadd.f32 %v420, %v584
  %v617 = vadd.f32 %v421, %v585
  %v618 = vadd.f32 %v422, %v586
  %v619 = vadd.f32 %v423, %v587
  %v620 = vadd.f32 %v424, %v588
  %v621 = vadd.f32 %v425, %v589
  %v622 = vadd.f32 %v426, %v590
  %v623 = vadd.f32 %v427, %v591
  %v624 = vadd.f32 %v428, %v592
  %v625 = vadd.f32 %v429, %v593
  %v626 = vadd.f32 %v430, %v594
  %v627 = vadd.f32 %v431, %v595
  %v628 = vadd.f32 %v432, %v596
  %v629 = vadd.f32 %v433, %v597
  %v630 = vadd.f32 %v434, %v598
  %v631 = vadd.f32 %v435, %v599
  %v632 = vadd.f32 %v436, %v600
  %v633 = vadd.f32 %v437, %v601
  %v634 = vadd.f32 %v438, %v602
  %v635 = vadd.f32 %v439, %v603
  %v636 = vadd.f32 %v440, %v604
  %v637 = vadd.f32 %v441, %v605
  %v638 = vadd.f32 %v442, %v606
  %v639 = vadd.f32 %v443, %v607
  %v640 = vadd.f32 %v444, %v608
  %v641 = vld [vmem:[%s2] sm:$0x1]
  %v643 = vlaneseq
  %v644 = vshrl.u32 %v643, 7
  %v645 = vsub.s32 0, %v644
  %v646 = vrot.slane %v641, %v645
  %v648 = vadd.f32 %v609, %v646
  %v649 = vadd.f32 %v610, %v646
  %v650 = vadd.f32 %v611, %v646
  %v651 = vadd.f32 %v612, %v646
  %v652 = vadd.f32 %v613, %v646
  %v653 = vadd.f32 %v614, %v646
  %v654 = vadd.f32 %v615, %v646
  %v655 = vadd.f32 %v616, %v646
  %v656 = vadd.f32 %v617, %v646
  %v657 = vadd.f32 %v618, %v646
  %v658 = vadd.f32 %v619, %v646
  %v659 = vadd.f32 %v620, %v646
  %v660 = vadd.f32 %v621, %v646
  %v661 = vadd.f32 %v622, %v646
  %v662 = vadd.f32 %v623, %v646
  %v663 = vadd.f32 %v624, %v646
  %v664 = vadd.f32 %v625, %v646
  %v665 = vadd.f32 %v626, %v646
  %v666 = vadd.f32 %v627, %v646
  %v667 = vadd.f32 %v628, %v646
  %v668 = vadd.f32 %v629, %v646
  %v669 = vadd.f32 %v630, %v646
  %v670 = vadd.f32 %v631, %v646
  %v671 = vadd.f32 %v632, %v646
  %v672 = vadd.f32 %v633, %v646
  %v673 = vadd.f32 %v634, %v646
  %v674 = vadd.f32 %v635, %v646
  %v675 = vadd.f32 %v636, %v646
  %v676 = vadd.f32 %v637, %v646
  %v677 = vadd.f32 %v638, %v646
  %v678 = vadd.f32 %v639, %v646
  %v679 = vadd.f32 %v640, %v646
  %v680 = vmax.f32 %v648, 0.0
  %v681 = vmax.f32 %v649, 0.0
  %v682 = vmax.f32 %v650, 0.0
  %v683 = vmax.f32 %v651, 0.0
  %v684 = vmax.f32 %v652, 0.0
  %v685 = vmax.f32 %v653, 0.0
  %v686 = vmax.f32 %v654, 0.0
  %v687 = vmax.f32 %v655, 0.0
  %v688 = vmax.f32 %v656, 0.0
  %v689 = vmax.f32 %v657, 0.0
  %v690 = vmax.f32 %v658, 0.0
  %v691 = vmax.f32 %v659, 0.0
  %v692 = vmax.f32 %v660, 0.0
  %v693 = vmax.f32 %v661, 0.0
  %v694 = vmax.f32 %v662, 0.0
  %v695 = vmax.f32 %v663, 0.0
  %v696 = vmax.f32 %v664, 0.0
  %v697 = vmax.f32 %v665, 0.0
  %v698 = vmax.f32 %v666, 0.0
  %v699 = vmax.f32 %v667, 0.0
  %v700 = vmax.f32 %v668, 0.0
  %v701 = vmax.f32 %v669, 0.0
  %v702 = vmax.f32 %v670, 0.0
  %v703 = vmax.f32 %v671, 0.0
  %v704 = vmax.f32 %v672, 0.0
  %v705 = vmax.f32 %v673, 0.0
  %v706 = vmax.f32 %v674, 0.0
  %v707 = vmax.f32 %v675, 0.0
  %v708 = vmax.f32 %v676, 0.0
  %v709 = vmax.f32 %v677, 0.0
  %v710 = vmax.f32 %v678, 0.0
  %v711 = vmax.f32 %v679, 0.0
  %v712 = vld [vmem:[%s3] sm:$0xff]
  %v713 = vld [vmem:[%s3 + $0x8] sm:$0xff]
  %v714 = vld [vmem:[%s3 + $0x10] sm:$0xff]
  %v715 = vld [vmem:[%s3 + $0x18] sm:$0xff]
  %v716 = vld [vmem:[%s4] sm:$0x1]
  %v718 = vlaneseq
  %v719 = vshrl.u32 %v718, 7
  %v720 = vsub.s32 0, %v719
  %v721 = vrot.slane %v716, %v720
  %vm723 = vcmask 261120
  %v725 = vsel %vm723, %v680, 0
  %v728 = vsel %vm723, %v681, 0
  %v731 = vsel %vm723, %v682, 0
  %v734 = vsel %vm723, %v683, 0
  %v737 = vsel %vm723, %v684, 0
  %v740 = vsel %vm723, %v685, 0
  %v743 = vsel %vm723, %v686, 0
  %v746 = vsel %vm723, %v687, 0
  %v749 = vsel %vm723, %v688, 0
  %v752 = vsel %vm723, %v689, 0
  %v755 = vsel %vm723, %v690, 0
  %v758 = vsel %vm723, %v691, 0
  %v761 = vsel %vm723, %v692, 0
  %v764 = vsel %vm723, %v693, 0
  %v767 = vsel %vm723, %v694, 0
  %v770 = vsel %vm723, %v695, 0
  %v773 = vsel %vm723, %v696, 0
  %v776 = vsel %vm723, %v697, 0
  %v779 = vsel %vm723, %v698, 0
  %v782 = vsel %vm723, %v699, 0
  %v785 = vsel %vm723, %v700, 0
  %v788 = vsel %vm723, %v701, 0
  %v791 = vsel %vm723, %v702, 0
  %v794 = vsel %vm723, %v703, 0
  %v797 = vsel %vm723, %v704, 0
  %v800 = vsel %vm723, %v705, 0
  %v803 = vsel %vm723, %v706, 0
  %v806 = vsel %vm723, %v707, 0
  %v809 = vsel %vm723, %v708, 0
  %v812 = vsel %vm723, %v709, 0
  %v815 = vsel %vm723, %v710, 0
  %v818 = vsel %vm723, %v711, 0
  %820 = vmatprep.subr.mxu0 0.0
  %821 = vmatpush1.msra.mxu0 %v712
  %822 = vmatprep.subr.mxu0 0.0
  %823 = vmatpush1.msra.mxu0 %v713
  %824 = vmatprep.subr.mxu0 0.0
  %825 = vmatpush1.msra.mxu0 %v714
  %826 = vmatprep.subr.mxu0 0.0
  %827 = vmatpush1.msra.mxu0 %v715
  %828 = vmatprep.subr.mxu0 0.0
  %829 = vmatpush1.msra.mxu0 0.0
  %830 = vmatprep.subr.mxu0 0.0
  %831 = vmatpush1.msra.mxu0 0.0
  %832 = vmatprep.subr.mxu0 0.0
  %833 = vmatpush1.msra.mxu0 0.0
  %834 = vmatprep.subr.mxu0 0.0
  %835 = vmatpush1.msra.mxu0 0.0
  %836 = vmatprep.subr.mxu0 0.0
  %837 = vmatpush1.msra.mxu0 0.0
  %838 = vmatprep.subr.mxu0 0.0
  %839 = vmatpush1.msra.mxu0 0.0
  %840 = vmatprep.subr.mxu0 0.0
  %841 = vmatpush1.msra.mxu0 0.0
  %842 = vmatprep.subr.mxu0 0.0
  %843 = vmatpush1.msra.mxu0 0.0
  %844 = vmatprep.subr.mxu0 0.0
  %845 = vmatpush1.msra.mxu0 0.0
  %846 = vmatprep.subr.mxu0 0.0
  %847 = vmatpush1.msra.mxu0 0.0
  %848 = vmatprep.subr.mxu0 0.0
  %849 = vmatpush1.msra.mxu0 0.0
  %850 = vmatprep.subr.mxu0 0.0
  %851 = vmatpush1.msra.mxu0 0.0
  %852 = vmatprep.subr.mxu0 0.0
  %853 = vmatpush1.msra.mxu0 0.0
  %854 = vmatprep.subr.mxu0 0.0
  %855 = vmatpush1.msra.mxu0 0.0
  %856 = vmatprep.subr.mxu0 0.0
  %857 = vmatpush1.msra.mxu0 0.0
  %858 = vmatprep.subr.mxu0 0.0
  %859 = vmatpush1.msra.mxu0 0.0
  %860 = vmatprep.subr.mxu0 0.0
  %861 = vmatpush1.msra.mxu0 0.0
  %862 = vmatprep.subr.mxu0 0.0
  %863 = vmatpush1.msra.mxu0 0.0
  %864 = vmatprep.subr.mxu0 0.0
  %865 = vmatpush1.msra.mxu0 0.0
  %866 = vmatprep.subr.mxu0 0.0
  %867 = vmatpush1.msra.mxu0 0.0
  %868 = vmatprep.subr.mxu0 0.0
  %869 = vmatpush1.msra.mxu0 0.0
  %870 = vmatprep.subr.mxu0 0.0
  %871 = vmatpush1.msra.mxu0 0.0
  %872 = vmatprep.subr.mxu0 0.0
  %873 = vmatpush1.msra.mxu0 0.0
  %874 = vmatprep.subr.mxu0 0.0
  %875 = vmatpush1.msra.mxu0 0.0
  %876 = vmatprep.subr.mxu0 0.0
  %877 = vmatpush1.msra.mxu0 0.0
  %878 = vmatprep.subr.mxu0 0.0
  %879 = vmatpush1.msra.mxu0 0.0
  %880 = vmatprep.subr.mxu0 0.0
  %881 = vmatpush1.msra.mxu0 0.0
  %882 = vmatprep.subr.mxu0 0.0
  %883 = vmatpush1.msra.mxu0 0.0
  %884 = vmatprep.mubr.f32.mxu0 0.0
  %885 = vmatmul.mubr.f32.gmra.mrb[0].mxu0 %v725
  %v886 = vpop.f32.mrb[0].mxu0
  %v887 = vadd.f32 %v721, %v886
  %v888 = vpop.f32.mrb[0].mxu0
  %889 = vmatprep.mubr.f32.mxu0 0.0
  %890 = vmatmul.mubr.f32.gmra.mrb[0].mxu0 %v728
  %v891 = vpop.f32.mrb[0].mxu0
  %v892 = vadd.f32 %v721, %v891
  %v893 = vpop.f32.mrb[0].mxu0
  %894 = vmatprep.mubr.f32.mxu0 0.0
  %895 = vmatmul.mubr.f32.gmra.mrb[0].mxu0 %v731
  %v896 = vpop.f32.mrb[0].mxu0
  %v897 = vadd.f32 %v721, %v896
  %v898 = vpop.f32.mrb[0].mxu0
  %899 = vmatprep.mubr.f32.mxu0 0.0
  %900 = vmatmul.mubr.f32.gmra.mrb[0].mxu0 %v734
  %v901 = vpop.f32.mrb[0].mxu0
  %v902 = vadd.f32 %v721, %v901
  %v903 = vpop.f32.mrb[0].mxu0
  %904 = vmatprep.mubr.f32.mxu0 0.0
  %905 = vmatmul.mubr.f32.gmra.mrb[0].mxu0 %v737
  %v906 = vpop.f32.mrb[0].mxu0
  %v907 = vadd.f32 %v721, %v906
  %v908 = vpop.f32.mrb[0].mxu0
  %909 = vmatprep.mubr.f32.mxu0 0.0
  %910 = vmatmul.mubr.f32.gmra.mrb[0].mxu0 %v740
  %v911 = vpop.f32.mrb[0].mxu0
  %v912 = vadd.f32 %v721, %v911
  %v913 = vpop.f32.mrb[0].mxu0
  %914 = vmatprep.mubr.f32.mxu0 0.0
  %915 = vmatmul.mubr.f32.gmra.mrb[0].mxu0 %v743
  %v916 = vpop.f32.mrb[0].mxu0
  %v917 = vadd.f32 %v721, %v916
  %v918 = vpop.f32.mrb[0].mxu0
  %919 = vmatprep.mubr.f32.mxu0 0.0
  %920 = vmatmul.mubr.f32.gmra.mrb[0].mxu0 %v746
  %v921 = vpop.f32.mrb[0].mxu0
  %v922 = vadd.f32 %v721, %v921
  %v923 = vpop.f32.mrb[0].mxu0
  %924 = vmatprep.mubr.f32.mxu0 0.0
  %925 = vmatmul.mubr.f32.gmra.mrb[0].mxu0 %v749
  %v926 = vpop.f32.mrb[0].mxu0
  %v927 = vadd.f32 %v721, %v926
  %v928 = vpop.f32.mrb[0].mxu0
  %929 = vmatprep.mubr.f32.mxu0 0.0
  %930 = vmatmul.mubr.f32.gmra.mrb[0].mxu0 %v752
  %v931 = vpop.f32.mrb[0].mxu0
  %v932 = vadd.f32 %v721, %v931
  %v933 = vpop.f32.mrb[0].mxu0
  %934 = vmatprep.mubr.f32.mxu0 0.0
  %935 = vmatmul.mubr.f32.gmra.mrb[0].mxu0 %v755
  %v936 = vpop.f32.mrb[0].mxu0
  %v937 = vadd.f32 %v721, %v936
  %v938 = vpop.f32.mrb[0].mxu0
  %939 = vmatprep.mubr.f32.mxu0 0.0
  %940 = vmatmul.mubr.f32.gmra.mrb[0].mxu0 %v758
  %v941 = vpop.f32.mrb[0].mxu0
  %v942 = vadd.f32 %v721, %v941
  %v943 = vpop.f32.mrb[0].mxu0
  %944 = vmatprep.mubr.f32.mxu0 0.0
  %945 = vmatmul.mubr.f32.gmra.mrb[0].mxu0 %v761
  %v946 = vpop.f32.mrb[0].mxu0
  %v947 = vadd.f32 %v721, %v946
  %v948 = vpop.f32.mrb[0].mxu0
  %949 = vmatprep.mubr.f32.mxu0 0.0
  %950 = vmatmul.mubr.f32.gmra.mrb[0].mxu0 %v764
  %v951 = vpop.f32.mrb[0].mxu0
  %v952 = vadd.f32 %v721, %v951
  %v953 = vpop.f32.mrb[0].mxu0
  %954 = vmatprep.mubr.f32.mxu0 0.0
  %955 = vmatmul.mubr.f32.gmra.mrb[0].mxu0 %v767
  %v956 = vpop.f32.mrb[0].mxu0
  %v957 = vadd.f32 %v721, %v956
  %v958 = vpop.f32.mrb[0].mxu0
  %959 = vmatprep.mubr.f32.mxu0 0.0
  %960 = vmatmul.mubr.f32.gmra.mrb[0].mxu0 %v770
  %v961 = vpop.f32.mrb[0].mxu0
  %v962 = vadd.f32 %v721, %v961
  %v963 = vpop.f32.mrb[0].mxu0
  %964 = vmatprep.mubr.f32.mxu0 0.0
  %965 = vmatmul.mubr.f32.gmra.mrb[0].mxu0 %v773
  %v966 = vpop.f32.mrb[0].mxu0
  %v967 = vadd.f32 %v721, %v966
  %v968 = vpop.f32.mrb[0].mxu0
  %969 = vmatprep.mubr.f32.mxu0 0.0
  %970 = vmatmul.mubr.f32.gmra.mrb[0].mxu0 %v776
  %v971 = vpop.f32.mrb[0].mxu0
  %v972 = vadd.f32 %v721, %v971
  %v973 = vpop.f32.mrb[0].mxu0
  %974 = vmatprep.mubr.f32.mxu0 0.0
  %975 = vmatmul.mubr.f32.gmra.mrb[0].mxu0 %v779
  %v976 = vpop.f32.mrb[0].mxu0
  %v977 = vadd.f32 %v721, %v976
  %v978 = vpop.f32.mrb[0].mxu0
  %979 = vmatprep.mubr.f32.mxu0 0.0
  %980 = vmatmul.mubr.f32.gmra.mrb[0].mxu0 %v782
  %v981 = vpop.f32.mrb[0].mxu0
  %v982 = vadd.f32 %v721, %v981
  %v983 = vpop.f32.mrb[0].mxu0
  %984 = vmatprep.mubr.f32.mxu0 0.0
  %985 = vmatmul.mubr.f32.gmra.mrb[0].mxu0 %v785
  %v986 = vpop.f32.mrb[0].mxu0
  %v987 = vadd.f32 %v721, %v986
  %v988 = vpop.f32.mrb[0].mxu0
  %989 = vmatprep.mubr.f32.mxu0 0.0
  %990 = vmatmul.mubr.f32.gmra.mrb[0].mxu0 %v788
  %v991 = vpop.f32.mrb[0].mxu0
  %v992 = vadd.f32 %v721, %v991
  %v993 = vpop.f32.mrb[0].mxu0
  %994 = vmatprep.mubr.f32.mxu0 0.0
  %995 = vmatmul.mubr.f32.gmra.mrb[0].mxu0 %v791
  %v996 = vpop.f32.mrb[0].mxu0
  %v997 = vadd.f32 %v721, %v996
  %v998 = vpop.f32.mrb[0].mxu0
  %999 = vmatprep.mubr.f32.mxu0 0.0
  %1000 = vmatmul.mubr.f32.gmra.mrb[0].mxu0 %v794
  %v1001 = vpop.f32.mrb[0].mxu0
  %v1002 = vadd.f32 %v721, %v1001
  %v1003 = vpop.f32.mrb[0].mxu0
  %1004 = vmatprep.mubr.f32.mxu0 0.0
  %1005 = vmatmul.mubr.f32.gmra.mrb[0].mxu0 %v797
  %v1006 = vpop.f32.mrb[0].mxu0
  %v1007 = vadd.f32 %v721, %v1006
  %v1008 = vpop.f32.mrb[0].mxu0
  %1009 = vmatprep.mubr.f32.mxu0 0.0
  %1010 = vmatmul.mubr.f32.gmra.mrb[0].mxu0 %v800
  %v1011 = vpop.f32.mrb[0].mxu0
  %v1012 = vadd.f32 %v721, %v1011
  %v1013 = vpop.f32.mrb[0].mxu0
  %1014 = vmatprep.mubr.f32.mxu0 0.0
  %1015 = vmatmul.mubr.f32.gmra.mrb[0].mxu0 %v803
  %v1016 = vpop.f32.mrb[0].mxu0
  %v1017 = vadd.f32 %v721, %v1016
  %v1018 = vpop.f32.mrb[0].mxu0
  %1019 = vmatprep.mubr.f32.mxu0 0.0
  %1020 = vmatmul.mubr.f32.gmra.mrb[0].mxu0 %v806
  %v1021 = vpop.f32.mrb[0].mxu0
  %v1022 = vadd.f32 %v721, %v1021
  %v1023 = vpop.f32.mrb[0].mxu0
  %1024 = vmatprep.mubr.f32.mxu0 0.0
  %1025 = vmatmul.mubr.f32.gmra.mrb[0].mxu0 %v809
  %v1026 = vpop.f32.mrb[0].mxu0
  %v1027 = vadd.f32 %v721, %v1026
  %v1028 = vpop.f32.mrb[0].mxu0
  %1029 = vmatprep.mubr.f32.mxu0 0.0
  %1030 = vmatmul.mubr.f32.gmra.mrb[0].mxu0 %v812
  %v1031 = vpop.f32.mrb[0].mxu0
  %v1032 = vadd.f32 %v721, %v1031
  %v1033 = vpop.f32.mrb[0].mxu0
  %1034 = vmatprep.mubr.f32.mxu0 0.0
  %1035 = vmatmul.mubr.f32.gmra.mrb[0].mxu0 %v815
  %v1036 = vpop.f32.mrb[0].mxu0
  %v1037 = vadd.f32 %v721, %v1036
  %v1038 = vpop.f32.mrb[0].mxu0
  %1039 = vmatprep.mubr.f32.mxu0 0.0
  %1040 = vmatmul.mubr.f32.gmra.mrb[0].mxu0 %v818
  %v1041 = vpop.f32.mrb[0].mxu0
  %v1042 = vadd.f32 %v721, %v1041
  %v1043 = vpop.f32.mrb[0].mxu0
  %1044 = vdwg.mxu0
  %1045 = vst.msk [vmem:[%s5] sm:$0xff] %vm723, %v887
  %1046 = vst.msk [vmem:[%s5 + $0x8] sm:$0xff] %vm723, %v892
  %1047 = vst.msk [vmem:[%s5 + $0x10] sm:$0xff] %vm723, %v897
  %1048 = vst.msk [vmem:[%s5 + $0x18] sm:$0xff] %vm723, %v902
  %1049 = vst.msk [vmem:[%s5 + $0x20] sm:$0xff] %vm723, %v907
  %1050 = vst.msk [vmem:[%s5 + $0x28] sm:$0xff] %vm723, %v912
  %1051 = vst.msk [vmem:[%s5 + $0x30] sm:$0xff] %vm723, %v917
  %1052 = vst.msk [vmem:[%s5 + $0x38] sm:$0xff] %vm723, %v922
  %1053 = vst.msk [vmem:[%s5 + $0x40] sm:$0xff] %vm723, %v927
  %1054 = vst.msk [vmem:[%s5 + $0x48] sm:$0xff] %vm723, %v932
  %1055 = vst.msk [vmem:[%s5 + $0x50] sm:$0xff] %vm723, %v937
  %1056 = vst.msk [vmem:[%s5 + $0x58] sm:$0xff] %vm723, %v942
  %1057 = vst.msk [vmem:[%s5 + $0x60] sm:$0xff] %vm723, %v947
  %1058 = vst.msk [vmem:[%s5 + $0x68] sm:$0xff] %vm723, %v952
  %1059 = vst.msk [vmem:[%s5 + $0x70] sm:$0xff] %vm723, %v957
  %1060 = vst.msk [vmem:[%s5 + $0x78] sm:$0xff] %vm723, %v962
  %1061 = vst.msk [vmem:[%s5 + $0x80] sm:$0xff] %vm723, %v967
  %1062 = vst.msk [vmem:[%s5 + $0x88] sm:$0xff] %vm723, %v972
  %1063 = vst.msk [vmem:[%s5 + $0x90] sm:$0xff] %vm723, %v977
  %1064 = vst.msk [vmem:[%s5 + $0x98] sm:$0xff] %vm723, %v982
  %1065 = vst.msk [vmem:[%s5 + $0xa0] sm:$0xff] %vm723, %v987
  %1066 = vst.msk [vmem:[%s5 + $0xa8] sm:$0xff] %vm723, %v992
  %1067 = vst.msk [vmem:[%s5 + $0xb0] sm:$0xff] %vm723, %v997
  %1068 = vst.msk [vmem:[%s5 + $0xb8] sm:$0xff] %vm723, %v1002
  %1069 = vst.msk [vmem:[%s5 + $0xc0] sm:$0xff] %vm723, %v1007
  %1070 = vst.msk [vmem:[%s5 + $0xc8] sm:$0xff] %vm723, %v1012
  %1071 = vst.msk [vmem:[%s5 + $0xd0] sm:$0xff] %vm723, %v1017
  %1072 = vst.msk [vmem:[%s5 + $0xd8] sm:$0xff] %vm723, %v1022
  %1073 = vst.msk [vmem:[%s5 + $0xe0] sm:$0xff] %vm723, %v1027
  %1074 = vst.msk [vmem:[%s5 + $0xe8] sm:$0xff] %vm723, %v1032
  %1075 = vst.msk [vmem:[%s5 + $0xf0] sm:$0xff] %vm723, %v1037
  %1076 = vst.msk [vmem:[%s5 + $0xf8] sm:$0xff] %vm723, %v1042
  // Predicated region
  $region22: #{tpu_custom_call.1} parent=0 // pred_check
    _
  $region23: #{tpu_custom_call.1} parent=0 // pred_check_branch
    %1078 = sbr.rel (0) target = $region25
  $region24: #{tpu_custom_call.1} parent=0 // pred_region
    _
  $region25: #{tpu_custom_call.1} parent=0 // pred_fallthru
    _
  // Predicated region
  $region26: #{tpu_custom_call.1} parent=0 // pred_check
    _
  $region27: #{tpu_custom_call.1} parent=0 // pred_check_branch
    %1080 = sbr.rel (0) target = $region29
  $region28: #{tpu_custom_call.1} parent=0 // pred_region
    _
  $region29: #{tpu_custom_call.1} parent=0 // pred_fallthru
    _

</llo_original>
